<compile_context>
chip_gen: v5e
topology: v5e:2x2
jax: 0.10.0
libtpu: 0.0.40
codegen_flags: <defaults>
</compile_context>

<pallas_src>
import jax
import jax.numpy as jnp
from jax import lax
from jax.experimental import pallas as pl
from jax.experimental.pallas import tpu as pltpu


def _round_up(x: int, m: int) -> int:
    return (x + m - 1) // m * m


def linear_kernel(x_ref, w_ref, b_ref, o_ref):
    # x_ref : (bm, dim)     input-feature tile (lane-dense on dim)
    # w_ref : (n_pad, dim)  weight in PyTorch layout, zero-padded along labels;
    #                       constant index_map -> fetched once, stays resident
    # b_ref : (1, n_pad)    f32 bias row (cast hoisted to the wrapper)
    # o_ref : (bm, n_pad)   lane-dense (128-multiple) output tile
    acc = lax.dot_general(
        x_ref[...], w_ref[...],
        dimension_numbers=(((1,), (1,)), ((), ())),  # contract on dim: x @ W.T
        preferred_element_type=jnp.float32,
    )
    o_ref[...] = (acc + b_ref[...]).astype(o_ref.dtype)


def linear_classifier(x, weight, bias, *, bm=None, compute_dtype=None,
                      vmem_budget_bytes=24 * 1024 * 1024):
    """PyTorch nn.Linear forward: y = x @ weight.T + bias.

    x:      [B, dim] ; weight: [num_labels, dim] (PyTorch layout, NOT
    transposed in the wrapper) ; bias: [num_labels].
    compute_dtype: optional narrower MXU streaming dtype (e.g. jnp.bfloat16);
    accumulation stays f32 and the output keeps x's original dtype.
    """
    B, dim = x.shape
    num_labels, dim_w = weight.shape
    assert dim_w == dim
    out_dtype = x.dtype

    # Lane-pad the label axis to a full 128-lane multiple (dense output stores).
    n_pad = _round_up(max(num_labels, 128), 128)

    # Optional bf16 streaming of the large operands (f32 accumulate in-kernel).
    if compute_dtype is not None:
        x = x.astype(compute_dtype)
        weight = weight.astype(compute_dtype)
    in_itemsize = jnp.dtype(x.dtype).itemsize

    # Pick the biggest batch tile that fits the VMEM budget (double-buffered
    # x + out tiles, plus the resident weight/bias).  Tiny tiles are pure
    # per-grid-step overhead (~0.35us/step).
    w_bytes = 2 * n_pad * dim * in_itemsize + 2 * n_pad * 4     # weight + bias
    per_row = 2 * (dim * in_itemsize + n_pad * 4)               # x + out rows
    if bm is None:
        bm = max(8, (vmem_budget_bytes - w_bytes) // per_row)
        bm = min(1024, bm)
        bm = min(bm, _round_up(B, 8))          # don't tile past the batch
        if B >= 16:
            # keep >= 2 grid steps so both v7x TensorCores are used
            bm = min(bm, _round_up(-(-B // 2), 8))
        bm = max(8, (bm // 8) * 8)
    assert bm % 8 == 0

    B_pad = _round_up(B, bm)

    # Wrapper glue: zero-pad operands; results are sliced back after the call.
    if B_pad != B:
        x = jnp.pad(x, ((0, B_pad - B), (0, 0)))
    if n_pad != num_labels:
        weight = jnp.pad(weight, ((0, n_pad - num_labels), (0, 0)))
        bias = jnp.pad(bias, (0, n_pad - num_labels))
    bias2 = bias.astype(jnp.float32).reshape(1, n_pad)  # cast once, not per tile

    grid = (B_pad // bm,)
    vmem_needed = w_bytes + per_row * bm + (2 << 20)
    # <= 32 MiB keeps the same tiling valid under v7x's halved VMEM.
    vmem_limit = int(min(max(vmem_needed, 16 << 20), 32 << 20))

    cost = pl.CostEstimate(
        flops=2 * B_pad * dim * n_pad,
        transcendentals=0,
        bytes_accessed=int(B_pad * dim * in_itemsize
                           + n_pad * dim * in_itemsize
                           + n_pad * 4
                           + B_pad * n_pad * jnp.dtype(out_dtype).itemsize),
    )

    out = pl.pallas_call(
        linear_kernel,
        out_shape=jax.ShapeDtypeStruct((B_pad, n_pad), out_dtype),
        grid_spec=pltpu.PrefetchScalarGridSpec(
            num_scalar_prefetch=0,
            grid=grid,
            in_specs=[
                pl.BlockSpec((bm, dim), lambda i: (i, 0)),
                # constant index maps: weight / bias are fetched once and kept
                # resident in VMEM across all grid steps (no re-DMA per step).
                pl.BlockSpec((n_pad, dim), lambda i: (0, 0)),
                pl.BlockSpec((1, n_pad), lambda i: (0, 0)),
            ],
            out_specs=pl.BlockSpec((bm, n_pad), lambda i: (i, 0)),
        ),
        compiler_params=pltpu.CompilerParams(
            dimension_semantics=("parallel",),
            vmem_limit_bytes=vmem_limit,
        ),
        cost_estimate=cost,
    )(x, weight, bias2)

    # Slice off the batch / label padding.
    return out[:B, :num_labels]


if __name__ == "__main__":
    # Small shapes consistent with the module: dim=128, num_labels=16.
    B, DIM, NUM_LABELS = 8, 128, 16

    key = jax.random.PRNGKey(0)
    k_x, k_w = jax.random.split(key)

    # Deterministic parameter init matching nn.init.normal_(std=0.01) / zeros_
    weight = 0.01 * jax.random.normal(k_w, (NUM_LABELS, DIM), dtype=jnp.float32)
    bias = jnp.zeros((NUM_LABELS,), dtype=jnp.float32)
    x = jax.random.normal(k_x, (B, DIM), dtype=jnp.float32)

    ref = x @ weight.T + bias

    # f32 path (exact semantics of the PyTorch module)
    out = jax.block_until_ready(linear_classifier(x, weight, bias))
    assert out.shape == (B, NUM_LABELS)
    assert jnp.allclose(out, ref, atol=1e-5, rtol=1e-5)

    # Larger batch: exercises multi-step grid + batch padding paths.
    x2 = jax.random.normal(jax.random.PRNGKey(1), (40, DIM), dtype=jnp.float32)
    ref2 = x2 @ weight.T + bias
    out2 = jax.block_until_ready(linear_classifier(x2, weight, bias))
    assert out2.shape == (40, NUM_LABELS)
    assert jnp.allclose(out2, ref2, atol=1e-5, rtol=1e-5)

    # Optional bf16-streaming path (halves dominant HBM read traffic; f32 acc).
    out_bf16 = jax.block_until_ready(
        linear_classifier(x, weight, bias, compute_dtype=jnp.bfloat16))
    assert out_bf16.shape == (B, NUM_LABELS)
    assert jnp.allclose(out_bf16, ref, atol=2e-2, rtol=2e-2)

    print("KERNEL_OK")
</pallas_src>

<mosaic_0001>
module attributes {stable_mosaic.version = 11 : i64} {
  func.func @linear_kernel(%arg0: i32, %arg1: memref<8x128xf32, #tpu.memory_space<vmem>>, %arg2: memref<128x128xf32, #tpu.memory_space<vmem>>, %arg3: memref<1x128xf32, #tpu.memory_space<vmem>>, %arg4: memref<8x128xf32, #tpu.memory_space<vmem>>) attributes {dimension_semantics = [#tpu.dimension_semantics<parallel>], iteration_bounds = array<i64: 1>, scalar_prefetch = 0 : i64, scratch_operands = 0 : i64, tpu.core_type = #tpu.core_type<tc>, window_params = [{transform_indices = @transform_0, window_bounds = array<i64: 8, 128>}, {pipeline_mode = #tpu.pipeline_mode<synchronous>, transform_indices = @transform_1, window_bounds = array<i64: 128, 128>}, {pipeline_mode = #tpu.pipeline_mode<synchronous>, transform_indices = @transform_2, window_bounds = array<i64: 1, 128>}, {transform_indices = @transform_3, window_bounds = array<i64: 8, 128>}]} {
    %c0 = arith.constant 0 : index
    %c0_0 = arith.constant 0 : index
    %0 = vector.load %arg1[%c0, %c0_0] : memref<8x128xf32, #tpu.memory_space<vmem>>, vector<8x128xf32>
    %c0_1 = arith.constant 0 : index
    %c0_2 = arith.constant 0 : index
    %1 = vector.load %arg2[%c0_1, %c0_2] : memref<128x128xf32, #tpu.memory_space<vmem>>, vector<128x128xf32>
    %cst = arith.constant dense<0.000000e+00> : vector<8x128xf32>
    %2 = tpu.matmul %0, %1, %cst {dimension_numbers = #tpu.dot_dimension_numbers<[1], [1], [0], [0], [0, 0, 1, 0], [], []>} : vector<8x128xf32>, vector<128x128xf32>, vector<8x128xf32> -> vector<8x128xf32>
    %c0_3 = arith.constant 0 : index
    %c0_4 = arith.constant 0 : index
    %3 = vector.load %arg3[%c0_3, %c0_4] : memref<1x128xf32, #tpu.memory_space<vmem>>, vector<1x128xf32>
    %4 = vector.broadcast %3 : vector<1x128xf32> to vector<8x128xf32>
    %5 = arith.addf %2, %4 : vector<8x128xf32>
    %c0_5 = arith.constant 0 : index
    %c0_6 = arith.constant 0 : index
    %6 = vector.load %arg4[%c0_5, %c0_6] : memref<8x128xf32, #tpu.memory_space<vmem>>, vector<8x128xf32>
    tpu.vector_store %arg4[%c0_5, %c0_6], %5 {strides = array<i32>} : memref<8x128xf32, #tpu.memory_space<vmem>>, vector<8x128xf32>,
    return
  }
  func.func @transform_0(%arg0: i32) -> (i32, i32) {
    %c0_i32 = arith.constant 0 : i32
    %c0_i32_0 = arith.constant 0 : i32
    return %arg0, %c0_i32 : i32, i32
  }
  func.func @transform_1(%arg0: i32) -> (i32, i32) {
    %c0_i32 = arith.constant 0 : i32
    %c0_i32_0 = arith.constant 0 : i32
    %c0_i32_1 = arith.constant 0 : i32
    return %c0_i32, %c0_i32_0 : i32, i32
  }
  func.func @transform_2(%arg0: i32) -> (i32, i32) {
    %c0_i32 = arith.constant 0 : i32
    %c0_i32_0 = arith.constant 0 : i32
    %c0_i32_1 = arith.constant 0 : i32
    return %c0_i32, %c0_i32_0 : i32, i32
  }
  func.func @transform_3(%arg0: i32) -> (i32, i32) {
    %c0_i32 = arith.constant 0 : i32
    %c0_i32_0 = arith.constant 0 : i32
    return %arg0, %c0_i32 : i32, i32
  }
}

</mosaic_0001>

<llo_original>
// kernel: tpu_custom_call.1
$region0: #{tpu_custom_call.1}
  #allocation0 [shape = 'u32[]', space=smem, size = 0x4, offset = 0x4, fixed_abs, tag = 'smem constant byte address 0x4 - core index']
  #allocation1 [shape = 'u32[72,128]{1,0:T(1,128)}', space=vmem, size = 0x9000, scoped, tag = 'internal scratch']
  %s0 = inlined_call_operand.hbm [shape: f32[8,128], index: 0, kind: input, shape index: {}]
  %s1 = inlined_call_operand.hbm [shape: f32[128,128], index: 1, kind: input, shape index: {}]
  %s2 = inlined_call_operand.vmem [shape: f32[1,128], index: 2, kind: input, shape index: {}]
  %s3 = inlined_call_operand.hbm [shape: f32[8,128], index: 3, kind: output, shape index: {}]
  %s4 = sld [smem:[#allocation0]]
  $region30: #{tpu_custom_call.1} parent=0
    _
  %s6 = ssub.s32 1, %s4
  %s7 = scalar_select 0, %s6, %s4
  $region1: #{tpu_custom_call.1} parent=0
    #allocation2 [shape = 'u8[4096]{0}', space=vmem, size = 0x1000, scoped, tag = 'input window, operand 0, single buffered']
    #allocation3 [shape = 's32[1]{0}', space=sflag, size = 0x4, scoped, tag = 'scoped memory for tpu_custom_call.1']
    #allocation4 [shape = 's32[1]{0}', space=sflag, size = 0x4, scoped, tag = 'scoped memory for tpu_custom_call.1']
    #allocation5 [shape = 'u8[65536]{0}', space=vmem, size = 0x10000, scoped, tag = 'input window, operand 1, single buffered']
    #allocation6 [shape = 's32[1]{0}', space=sflag, size = 0x4, scoped, tag = 'scoped memory for tpu_custom_call.1']
    #allocation7 [shape = 'u8[4096]{0}', space=vmem, size = 0x1000, scoped, tag = 'output window, operand 0, single buffered']
    %8 = vsyncpa [#allocation3], 0
    %9 = vsyncpa [#allocation6], 0
    %10 = vsyncpa [#allocation4], 0
    // Predicated region
    $region2: #{tpu_custom_call.1} parent=1 // pred_check
      _
    $region3: #{tpu_custom_call.1} parent=1 // pred_check_branch
      %12 = sbr.rel (0) target = $region5
    $region4: #{tpu_custom_call.1} parent=1 // pred_region
      %14 = vsyncadd [#allocation3], 0
      %s16 = sshll.u32 %s0, 4
      %s17 = int_to_ptr.hbm [resolvable:$true] %s16
      %s18 = sshll.u32 [#allocation2], 4
      %s19 = int_to_ptr.vmem [resolvable:$true] %s18
      %21 = dma.hbm_to_vmem [thread:$0]  %s17, 128, %s19, [#allocation3]
    $region5: #{tpu_custom_call.1} parent=1 // pred_fallthru
      _
    // Predicated region
    $region6: #{tpu_custom_call.1} parent=1 // pred_check
      _
    $region7: #{tpu_custom_call.1} parent=1 // pred_check_branch
      %23 = sbr.rel (0) target = $region9
    $region8: #{tpu_custom_call.1} parent=1 // pred_region
      %25 = vsyncadd [#allocation6], 0
      %s26 = sshll.u32 %s1, 4
      %s27 = int_to_ptr.hbm [resolvable:$true] %s26
      %s28 = sshll.u32 [#allocation5], 4
      %s29 = int_to_ptr.vmem [resolvable:$true] %s28
      %34 = dma.hbm_to_vmem [thread:$0]  %s27, 2048, %s29, [#allocation6], 128, 128, 8
    $region9: #{tpu_custom_call.1} parent=1 // pred_fallthru
      _
    // Predicated region
    $region10: #{tpu_custom_call.1} parent=1 // pred_check
      _
    $region11: #{tpu_custom_call.1} parent=1 // pred_check_branch
      %36 = sbr.rel (0) target = $region13
    $region12: #{tpu_custom_call.1} parent=1 // pred_region
      _
    $region13: #{tpu_custom_call.1} parent=1 // pred_fallthru
      _
    // Predicated region
    $region14: #{tpu_custom_call.1} parent=1 // pred_check
      _
    $region15: #{tpu_custom_call.1} parent=1 // pred_check_branch
      %38 = sbr.rel (0) target = $region17
    $region16: #{tpu_custom_call.1} parent=1 // pred_region
      %40 = dma.done [#allocation3], 128
    $region17: #{tpu_custom_call.1} parent=1 // pred_fallthru
      _
    // Predicated region
    $region18: #{tpu_custom_call.1} parent=1 // pred_check
      _
    $region19: #{tpu_custom_call.1} parent=1 // pred_check_branch
      %42 = sbr.rel (0) target = $region21
    $region20: #{tpu_custom_call.1} parent=1 // pred_region
      %44 = dma.done [#allocation6], 2048
    $region21: #{tpu_custom_call.1} parent=1 // pred_fallthru
      _
    %v45 = vld [vmem:[#allocation2] sm:$0xff]
    %v46 = vld [vmem:[#allocation5] sm:$0xff]
    %v47 = vld [vmem:[#allocation5 + $0x8] sm:$0xff]
    %v48 = vld [vmem:[#allocation5 + $0x10] sm:$0xff]
    %v49 = vld [vmem:[#allocation5 + $0x18] sm:$0xff]
    %v50 = vld [vmem:[#allocation5 + $0x20] sm:$0xff]
    %v51 = vld [vmem:[#allocation5 + $0x28] sm:$0xff]
    %v52 = vld [vmem:[#allocation5 + $0x30] sm:$0xff]
    %v53 = vld [vmem:[#allocation5 + $0x38] sm:$0xff]
    %v54 = vld [vmem:[#allocation5 + $0x40] sm:$0xff]
    %v55 = vld [vmem:[#allocation5 + $0x48] sm:$0xff]
    %v56 = vld [vmem:[#allocation5 + $0x50] sm:$0xff]
    %v57 = vld [vmem:[#allocation5 + $0x58] sm:$0xff]
    %v58 = vld [vmem:[#allocation5 + $0x60] sm:$0xff]
    %v59 = vld [vmem:[#allocation5 + $0x68] sm:$0xff]
    %v60 = vld [vmem:[#allocation5 + $0x70] sm:$0xff]
    %v61 = vld [vmem:[#allocation5 + $0x78] sm:$0xff]
    %v62 = vld [vmem:[%s2] sm:$0x1]
    %v64 = vperm.slane %v62, 0
    %66 = vmatpush.xpose.msra.mxu0 %v61
    %67 = vmatpush.xpose.msra.mxu0 %v60
    %68 = vmatpush.xpose.msra.mxu0 %v59
    %69 = vmatpush.xpose.msra.mxu0 %v58
    %70 = vmatpush.xpose.msra.mxu0 %v57
    %71 = vmatpush.xpose.msra.mxu0 %v56
    %72 = vmatpush.xpose.msra.mxu0 %v55
    %73 = vmatpush.xpose.msra.mxu0 %v54
    %74 = vmatpush.xpose.msra.mxu0 %v53
    %75 = vmatpush.xpose.msra.mxu0 %v52
    %76 = vmatpush.xpose.msra.mxu0 %v51
    %77 = vmatpush.xpose.msra.mxu0 %v50
    %78 = vmatpush.xpose.msra.mxu0 %v49
    %79 = vmatpush.xpose.msra.mxu0 %v48
    %80 = vmatpush.xpose.msra.mxu0 %v47
    %81 = vmatpush.xpose.msra.mxu0 %v46
    %82 = vmatmul.f32.gmra.mxu0 %v45
    %v83 = vpop.f32.mrf.mxu0
    %v84 = vadd.f32 %v64, %v83
    %85 = vdwg.mxu0
    %86 = vst [vmem:[#allocation7] sm:$0xff] %v84
    // Predicated region
    $region22: #{tpu_custom_call.1} parent=1 // pred_check
      _
    $region23: #{tpu_custom_call.1} parent=1 // pred_check_branch
      %88 = sbr.rel (0) target = $region25
    $region24: #{tpu_custom_call.1} parent=1 // pred_region
      %90 = vsyncadd [#allocation4], 0
      %s92 = sshll.u32 [#allocation7], 4
      %s93 = int_to_ptr.vmem [resolvable:$true] %s92
      %s94 = sshll.u32 %s3, 4
      %s95 = int_to_ptr.hbm [resolvable:$true] %s94
      %97 = dma.vmem_to_hbm [thread:$0]  %s93, 128, %s95, [#allocation4]
    $region25: #{tpu_custom_call.1} parent=1 // pred_fallthru
      _
    // Predicated region
    $region26: #{tpu_custom_call.1} parent=1 // pred_check
      _
    $region27: #{tpu_custom_call.1} parent=1 // pred_check_branch
      %99 = sbr.rel (0) target = $region29
    $region28: #{tpu_custom_call.1} parent=1 // pred_region
      %101 = dma.done [#allocation4], 128
    $region29: #{tpu_custom_call.1} parent=1 // pred_fallthru
      _
    %102 = vsyncpa [#allocation3], 1
    %103 = vsyncpa [#allocation6], 1
    %104 = vsyncpa [#allocation4], 1

</llo_original>
